<compile_context>
chip_gen: v5e
topology: v5e:2x2
jax: 0.10.0
libtpu: 0.0.40
codegen_flags: <defaults>
</compile_context>

<pallas_src>
import math

import jax
import jax.numpy as jnp
from jax import lax
from jax.experimental import pallas as pl
from jax.experimental.pallas import tpu as pltpu


_INV_SQRT2 = 1.0 / math.sqrt(2.0)


def _round_up(x, m):
    return (x + m - 1) // m * m


def _gelu_f32(y):
    # Exact erf-based GELU (torch.nn.GELU default), computed in f32.
    # TODO(synk): optionally switch to the tanh approximation (EUP slot) if the
    # epilogue ever shows up in profiles; it changes numerics slightly.
    return 0.5 * y * (1.0 + lax.erf(y * _INV_SQRT2))


def _vmem_limit_bytes():
    """Per-generation scoped-VMEM limit with headroom.

    v5e/v6e (128 MiB physical) -> ~100 MiB scoped; v7x (64 MiB/TC) -> ~48 MiB.
    """
    cap = 64 * 1024 * 1024
    try:
        cap = int(pltpu.get_tpu_info().vmem_capacity_bytes)
    except Exception:
        pass
    return int(max(16 * 1024 * 1024, min(cap - 16 * 1024 * 1024, 100 * 1024 * 1024)))


# --------------------------------------------------------------------------- #
# Kernels
# --------------------------------------------------------------------------- #
def _mlp_fused_kernel(x_ref, w_ref, b_ref, o_ref):
    """Single-K-tile path: one dot over the full reduction, bias+GELU fused."""
    w = w_ref[...]                         # (K, tn), already in MXU dtype
    x = x_ref[...].astype(w.dtype)         # in-kernel cast (hides under MXU)
    y = jnp.dot(x, w, preferred_element_type=jnp.float32)
    y = y + b_ref[...].astype(jnp.float32)
    o_ref[...] = _gelu_f32(y).astype(o_ref.dtype)


def _mlp_reduce_kernel(x_ref, w_ref, b_ref, o_ref, acc_ref):
    """Fallback path for very large n_in: K tiled as innermost grid axis."""
    k = pl.program_id(2)

    @pl.when(k == 0)
    def _():
        acc_ref[...] = jnp.zeros_like(acc_ref)

    w = w_ref[...]                         # (tk, tn)
    x = x_ref[...].astype(w.dtype)         # (tm, tk)
    acc_ref[...] += jnp.dot(x, w, preferred_element_type=jnp.float32)

    @pl.when(k == pl.num_programs(2) - 1)
    def _():
        y = acc_ref[...] + b_ref[...].astype(jnp.float32)
        o_ref[...] = _gelu_f32(y).astype(o_ref.dtype)


# --------------------------------------------------------------------------- #
# Tile selection
# --------------------------------------------------------------------------- #
def _select_fused_tiles(m, n_in, n_out, x_bytes, op_bytes, out_bytes, budget,
                        tm_req=None, tn_req=None):
    # tn: keep the whole weight resident (tn == n_out) whenever it fits VMEM.
    if tn_req is not None:
        tn = n_out if tn_req >= n_out else max(128, (tn_req // 128) * 128)
    else:
        tn = n_out
        while tn > 128 and 2 * n_in * tn * op_bytes > budget // 3:
            cand = max(128, _round_up(tn // 2, 128))
            if cand >= tn:
                break
            tn = cand

    # tm: biggest multiple of 8 that keeps the double-buffered tiles in budget.
    fixed = 2 * n_in * tn * op_bytes + 2 * tn * 4           # W + bias buffers
    per_row = 2 * n_in * x_bytes + 2 * tn * out_bytes       # x + out buffers
    tm_cap = 1024 if tm_req is None else tm_req
    tm = min(_round_up(m, 8), max(8, _round_up(tm_cap, 8)))
    while tm > 8 and fixed + tm * per_row > budget:
        tm = max(8, _round_up(tm // 2, 8))

    # v7x has 2 TensorCores sharded over parallel grid axes: make sure the
    # parallel grid has >=2 tiles when there is anything to split.
    if tm_req is None and m > 8 and pl.cdiv(m, tm) * pl.cdiv(n_out, tn) == 1:
        tm = _round_up((m + 1) // 2, 8)
    return tm, tn


def _select_reduce_tiles(m, n_in, n_out, x_bytes, op_bytes, out_bytes, budget,
                         tm_req=None, tn_req=None, tk_req=None):
    tk_cap = 512 if tk_req is None else tk_req
    tk = min(_round_up(n_in, 128), max(128, _round_up(tk_cap, 128)))

    if tn_req is not None:
        tn = n_out if tn_req >= n_out else max(128, (tn_req // 128) * 128)
    else:
        tn = n_out if n_out <= 512 else 512

    fixed = 2 * tk * tn * op_bytes + 2 * tn * 4
    per_row = 2 * tk * x_bytes + 2 * tn * out_bytes + tn * 4  # + f32 accumulator
    tm_cap = 512 if tm_req is None else tm_req
    tm = min(_round_up(m, 8), max(8, _round_up(tm_cap, 8)))
    while tm > 8 and fixed + tm * per_row > budget:
        tm = max(8, _round_up(tm // 2, 8))
    return tm, tn, tk


# --------------------------------------------------------------------------- #
# Parameter prep (one-time) + forward
# --------------------------------------------------------------------------- #
def prepare_mlp_params(weight, bias, *, mxu_dtype=jnp.bfloat16):
    """One-time weight/bias prep -- hoist this out of the per-step path.

    weight: (n_out, n_in)  (torch nn.Linear layout) -> w_t: (n_in, n_out)
    bias:   (n_out,)                                -> b2:  (1, n_out) f32
    """
    n_out, n_in = weight.shape
    w_t = weight.T
    if mxu_dtype is not None:
        w_t = w_t.astype(mxu_dtype)
    b2 = bias.reshape(1, n_out).astype(jnp.float32)
    return w_t, b2


def mlp_forward(x, w_t, b2, *, tm=None, tn=None, tk=None, max_fused_k=None):
    """GELU(x @ W^T + b) with W pre-transposed as w_t = (n_in, n_out)."""
    n_in, n_out = w_t.shape
    orig_shape = x.shape
    assert orig_shape[-1] == n_in
    out_dtype = x.dtype

    x2d = x.reshape(-1, n_in)
    m = x2d.shape[0]

    x_bytes = jnp.dtype(x2d.dtype).itemsize
    op_bytes = jnp.dtype(w_t.dtype).itemsize          # MXU operand width
    out_bytes = jnp.dtype(out_dtype).itemsize

    vmem_limit = _vmem_limit_bytes()
    budget = (vmem_limit * 3) // 4                     # headroom for scratch

    if max_fused_k is None:
        max_fused_k = 4096 if op_bytes <= 2 else 2048

    if n_in <= max_fused_k:
        # ---- fast path: no K grid axis, no accumulator, fused epilogue ---- #
        tm_, tn_ = _select_fused_tiles(m, n_in, n_out, x_bytes, op_bytes,
                                       out_bytes, budget, tm, tn)
        grid = (pl.cdiv(m, tm_), pl.cdiv(n_out, tn_))
        cost = pl.CostEstimate(
            flops=2 * m * n_in * n_out,
            transcendentals=m * n_out,
            bytes_accessed=m * n_in * x_bytes + n_in * n_out * op_bytes
            + n_out * 4 + m * n_out * out_bytes,
        )
        out2d = pl.pallas_call(
            _mlp_fused_kernel,
            out_shape=jax.ShapeDtypeStruct((m, n_out), out_dtype),
            grid_spec=pltpu.PrefetchScalarGridSpec(
                num_scalar_prefetch=0,
                grid=grid,
                in_specs=[
                    # activations: tiled over M only, full K per tile
                    pl.BlockSpec((tm_, n_in), lambda i, j: (i, 0)),
                    # weight (n_in, n_out): N-tiled; resident when grid_n == 1
                    pl.BlockSpec((n_in, tn_), lambda i, j: (0, j)),
                    # bias: N-tiled
                    pl.BlockSpec((1, tn_), lambda i, j: (0, j)),
                ],
                out_specs=pl.BlockSpec((tm_, tn_), lambda i, j: (i, j)),
            ),
            compiler_params=pltpu.CompilerParams(
                dimension_semantics=("parallel", "parallel"),
                vmem_limit_bytes=vmem_limit,
            ),
            cost_estimate=cost,
        )(x2d, w_t, b2)
    else:
        # ---- fallback: very large n_in -> K reduction on the grid ---- #
        tm_, tn_, tk_ = _select_reduce_tiles(m, n_in, n_out, x_bytes, op_bytes,
                                             out_bytes, budget, tm, tn, tk)
        kp = _round_up(n_in, tk_)
        if kp != n_in:
            # K padding must be exact zeros (it feeds every output element).
            # TODO(synk): hoist the weight K-pad into prepare_mlp_params for
            # production use; this path only triggers for very large n_in.
            x2d = jnp.pad(x2d, ((0, 0), (0, kp - n_in)))
            w_t = jnp.pad(w_t, ((0, kp - n_in), (0, 0)))
        grid = (pl.cdiv(m, tm_), pl.cdiv(n_out, tn_), kp // tk_)
        cost = pl.CostEstimate(
            flops=2 * m * kp * n_out,
            transcendentals=m * n_out,
            bytes_accessed=m * kp * x_bytes + kp * n_out * op_bytes
            + n_out * 4 + m * n_out * out_bytes,
        )
        out2d = pl.pallas_call(
            _mlp_reduce_kernel,
            out_shape=jax.ShapeDtypeStruct((m, n_out), out_dtype),
            grid_spec=pltpu.PrefetchScalarGridSpec(
                num_scalar_prefetch=0,
                grid=grid,
                in_specs=[
                    pl.BlockSpec((tm_, tk_), lambda i, j, k: (i, k)),
                    pl.BlockSpec((tk_, tn_), lambda i, j, k: (k, j)),
                    pl.BlockSpec((1, tn_), lambda i, j, k: (0, j)),
                ],
                out_specs=pl.BlockSpec((tm_, tn_), lambda i, j, k: (i, j)),
                scratch_shapes=[pltpu.VMEM((tm_, tn_), jnp.float32)],
            ),
            compiler_params=pltpu.CompilerParams(
                dimension_semantics=("parallel", "parallel", "arbitrary"),
                vmem_limit_bytes=vmem_limit,
            ),
            cost_estimate=cost,
        )(x2d, w_t, b2)

    return out2d.reshape(*orig_shape[:-1], n_out)


def mlp_pallas(x, weight, bias, *, mxu_dtype=jnp.bfloat16, tm=None, tn=None,
               tk=None, max_fused_k=None):
    """GELU(x @ weight.T + bias); weight: (n_out, n_in), bias: (n_out,).

    Convenience wrapper (prep + forward).  In a real model call
    prepare_mlp_params once at parameter-load time and mlp_forward per step.
    """
    w_t, b2 = prepare_mlp_params(weight, bias, mxu_dtype=mxu_dtype)
    return mlp_forward(x, w_t, b2, tm=tm, tn=tn, tk=tk, max_fused_k=max_fused_k)


def _reference(x, weight, bias):
    y = jnp.einsum("...i,oi->...o", x, weight) + bias
    return 0.5 * y * (1.0 + lax.erf(y / jnp.sqrt(2.0)))


if __name__ == "__main__":
    key = jax.random.PRNGKey(0)

    # --- Test 1: module-sized shapes, f32 MXU operands (exact path) --------- #
    k_x, k_w, k_b = jax.random.split(key, 3)
    batch, seq, n_in, n_out = 2, 8, 32, 32
    bound = 1.0 / math.sqrt(n_in)
    weight = jax.random.uniform(k_w, (n_out, n_in), jnp.float32, -bound, bound)
    bias = jax.random.uniform(k_b, (n_out,), jnp.float32, -bound, bound)
    x = jax.random.normal(k_x, (batch, seq, n_in), jnp.float32)
    ref = _reference(x, weight, bias)

    out_f32 = mlp_pallas(x, weight, bias, mxu_dtype=None)
    jax.block_until_ready(out_f32)
    assert out_f32.shape == (batch, seq, n_out)
    assert jnp.allclose(out_f32, ref, atol=1e-5, rtol=1e-5), "mismatch (f32 fused)"

    # --- Test 1b: default bf16 MXU operands, f32 accumulation --------------- #
    out_bf16 = mlp_pallas(x, weight, bias)  # mxu_dtype=bf16 default
    jax.block_until_ready(out_bf16)
    assert jnp.allclose(out_bf16, ref, atol=3e-2, rtol=3e-2), "mismatch (bf16 fused)"

    # --- Test 2: multi-tile (M,N) fused grid, partial-N-friendly shapes ----- #
    k_x2, k_w2, k_b2 = jax.random.split(jax.random.PRNGKey(1), 3)
    batch2, seq2, n_in2, n_out2 = 4, 96, 256, 384  # M = 384
    bound2 = 1.0 / math.sqrt(n_in2)
    weight2 = jax.random.uniform(k_w2, (n_out2, n_in2), jnp.float32, -bound2, bound2)
    bias2 = jax.random.uniform(k_b2, (n_out2,), jnp.float32, -bound2, bound2)
    x2 = jax.random.normal(k_x2, (batch2, seq2, n_in2), jnp.float32)
    ref2 = _reference(x2, weight2, bias2)

    out2 = mlp_pallas(x2, weight2, bias2, mxu_dtype=None, tm=128, tn=128)
    jax.block_until_ready(out2)
    assert out2.shape == (batch2, seq2, n_out2)
    assert jnp.allclose(out2, ref2, atol=1e-4, rtol=1e-4), "mismatch (fused tiled)"

    # --- Test 3: force the 3-D K-reduction fallback path -------------------- #
    out3 = mlp_pallas(x2, weight2, bias2, mxu_dtype=None, tm=128, tn=128, tk=128,
                      max_fused_k=128)
    jax.block_until_ready(out3)
    assert jnp.allclose(out3, ref2, atol=1e-4, rtol=1e-4), "mismatch (reduce path)"

    print("KERNEL_OK")
</pallas_src>

<mosaic_0001>
module attributes {stable_mosaic.version = 11 : i64} {
  func.func @_mlp_fused_kernel(%arg0: i32, %arg1: i32, %arg2: memref<8x32xf32, #tpu.memory_space<vmem>>, %arg3: memref<32x32xf32, #tpu.memory_space<vmem>>, %arg4: memref<1x32xf32, #tpu.memory_space<vmem>>, %arg5: memref<8x32xf32, #tpu.memory_space<vmem>>) attributes {dimension_semantics = [#tpu.dimension_semantics<parallel>, #tpu.dimension_semantics<parallel>], iteration_bounds = array<i64: 2, 1>, scalar_prefetch = 0 : i64, scratch_operands = 0 : i64, tpu.core_type = #tpu.core_type<tc>, window_params = [{transform_indices = @transform_0, window_bounds = array<i64: 8, 32>}, {transform_indices = @transform_1, window_bounds = array<i64: 32, 32>}, {transform_indices = @transform_2, window_bounds = array<i64: 1, 32>}, {transform_indices = @transform_3, window_bounds = array<i64: 8, 32>}]} {
    %c0 = arith.constant 0 : index
    %c0_0 = arith.constant 0 : index
    %0 = vector.load %arg3[%c0, %c0_0] : memref<32x32xf32, #tpu.memory_space<vmem>>, vector<32x32xf32>
    %c0_1 = arith.constant 0 : index
    %c0_2 = arith.constant 0 : index
    %1 = vector.load %arg2[%c0_1, %c0_2] : memref<8x32xf32, #tpu.memory_space<vmem>>, vector<8x32xf32>
    %cst = arith.constant dense<0.000000e+00> : vector<8x32xf32>
    %2 = tpu.matmul %1, %0, %cst {dimension_numbers = #tpu.dot_dimension_numbers<[1], [0], [0], [1], [0, 0, 1, 1], [], []>} : vector<8x32xf32>, vector<32x32xf32>, vector<8x32xf32> -> vector<8x32xf32>
    %c0_3 = arith.constant 0 : index
    %c0_4 = arith.constant 0 : index
    %3 = vector.load %arg4[%c0_3, %c0_4] : memref<1x32xf32, #tpu.memory_space<vmem>>, vector<1x32xf32>
    %4 = vector.broadcast %3 : vector<1x32xf32> to vector<8x32xf32>
    %5 = arith.addf %2, %4 : vector<8x32xf32>
    %cst_5 = arith.constant 5.000000e-01 : f32
    %6 = vector.broadcast %cst_5 : f32 to vector<8x32xf32>
    %7 = arith.mulf %6, %5 : vector<8x32xf32>
    %cst_6 = arith.constant 0.707106769 : f32
    %8 = vector.broadcast %cst_6 : f32 to vector<8x32xf32>
    %9 = arith.mulf %5, %8 : vector<8x32xf32>
    %10 = math.erf %9 : vector<8x32xf32>
    %cst_7 = arith.constant 1.000000e+00 : f32
    %11 = vector.broadcast %cst_7 : f32 to vector<8x32xf32>
    %12 = arith.addf %11, %10 : vector<8x32xf32>
    %13 = arith.mulf %7, %12 : vector<8x32xf32>
    %c0_8 = arith.constant 0 : index
    %c0_9 = arith.constant 0 : index
    %14 = vector.load %arg5[%c0_8, %c0_9] : memref<8x32xf32, #tpu.memory_space<vmem>>, vector<8x32xf32>
    tpu.vector_store %arg5[%c0_8, %c0_9], %13 {strides = array<i32>} : memref<8x32xf32, #tpu.memory_space<vmem>>, vector<8x32xf32>,
    return
  }
  func.func @transform_0(%arg0: i32, %arg1: i32) -> (i32, i32) {
    %c0_i32 = arith.constant 0 : i32
    %c0_i32_0 = arith.constant 0 : i32
    return %arg0, %c0_i32 : i32, i32
  }
  func.func @transform_1(%arg0: i32, %arg1: i32) -> (i32, i32) {
    %c0_i32 = arith.constant 0 : i32
    %c0_i32_0 = arith.constant 0 : i32
    return %c0_i32, %arg1 : i32, i32
  }
  func.func @transform_2(%arg0: i32, %arg1: i32) -> (i32, i32) {
    %c0_i32 = arith.constant 0 : i32
    %c0_i32_0 = arith.constant 0 : i32
    return %c0_i32, %arg1 : i32, i32
  }
  func.func @transform_3(%arg0: i32, %arg1: i32) -> (i32, i32) {
    %c0_i32 = arith.constant 0 : i32
    return %arg0, %arg1 : i32, i32
  }
}

</mosaic_0001>

<llo_original>
// kernel: tpu_custom_call.1
$region0: #{tpu_custom_call.1}
  #allocation0 [shape = 'u32[]', space=smem, size = 0x4, offset = 0x4, fixed_abs, tag = 'smem constant byte address 0x4 - core index']
  #allocation1 [shape = 'u32[72,128]{1,0:T(1,128)}', space=vmem, size = 0x9000, scoped, tag = 'internal scratch']
  %s0 = inlined_call_operand.hbm [shape: f32[16,32], index: 0, kind: input, shape index: {}]
  %s1 = inlined_call_operand.hbm [shape: f32[32,32], index: 1, kind: input, shape index: {}]
  %s2 = inlined_call_operand.vmem [shape: f32[1,32], index: 2, kind: input, shape index: {}]
  %s3 = inlined_call_operand.hbm [shape: f32[16,32], index: 3, kind: output, shape index: {}]
  %s4 = sld [smem:[#allocation0]]
  $region53: #{tpu_custom_call.1} parent=0
    _
  %s6 = ssub.s32 1, %s4
  %s7 = scalar_select 0, %s6, %s4
  $region1: #{tpu_custom_call.1} parent=0
    #allocation2 [shape = 'u8[8192]{0}', space=vmem, size = 0x2000, scoped, tag = 'input window, operand 0']
    #allocation3 [shape = 's32[2]{0}', space=sflag, size = 0x8, scoped, tag = 'scoped memory for tpu_custom_call.1']
    #allocation4 [shape = 's32[2]{0}', space=sflag, size = 0x8, scoped, tag = 'scoped memory for tpu_custom_call.1']
    #allocation5 [shape = 'u8[16384]{0}', space=vmem, size = 0x4000, scoped, tag = 'input window, operand 1, single buffered']
    #allocation6 [shape = 's32[1]{0}', space=sflag, size = 0x4, scoped, tag = 'scoped memory for tpu_custom_call.1']
    #allocation7 [shape = 'u8[8192]{0}', space=vmem, size = 0x2000, scoped, tag = 'output window, operand 0']
    %8 = vsyncpa [#allocation3], 0
    %s9 = scalar_lea.sflag [#allocation3], 1
    %10 = vsyncpa %s9, 0
    %11 = vsyncpa [#allocation6], 0
    %12 = vsyncpa [#allocation4], 0
    %s13 = scalar_lea.sflag [#allocation4], 1
    %14 = vsyncpa %s13, 0
    loop: start=0, step=1, limit=4
    $region2: #{tpu_custom_call.1} parent=1 // loop_pre_header
      _
    $region3: #{tpu_custom_call.1} parent=1 // loop_header
      %s16 = sphi 0, %s20
      %p17 = scmp.ge.s32.totalorder %s16, 4
      %s23 = sphi 0, %s35
      %s24 = sphi 0, %s31
      %s25 = sphi 0, %s23
      %s26 = sphi 0, %s24
      %s27 = sphi 0, %s25
      %s28 = sphi 0, %s26
      %s38 = sphi 0, %s40
      %s41 = sphi 0, %s38
      %s42 = sphi 0, %s41
      %s58 = sphi 0, %s42
      %s64 = sphi 0, %s66
      %s67 = sphi 0, %s64
      %s68 = sphi 0, %s67
      %s84 = sphi 0, %s68
      %s90 = sphi 0, %s92
      %s93 = sphi 0, %s90
      %s94 = sphi 0, %s93
      %s110 = sphi 0, %s94
      %s118 = sphi 0, %s120
      %s121 = sphi 0, %s118
      %s122 = sphi 0, %s121
      %s138 = sphi 0, %s122
    $region4: #{tpu_custom_call.1} parent=1 // loop_header_branch
      %19 = sbr.rel (%p17) target = $region8
    $region5: #{tpu_custom_call.1} parent=1 // loop_body
      %s21 = ssub.s32 %s16, 1
      %s22 = ssub.s32 %s16, 2
      %s29 = sadd.s32 1, %s24
      %p30 = scmp.ge.s32.totalorder %s29, 1
      %s31 = scalar_select %p30, 0, %s29
      %s32 = sadd.s32 1, %s23
      %s33 = scalar_select %p30, %s32, %s23
      %p34 = scmp.ge.s32.totalorder %s33, 2
      %s35 = scalar_select %p34, 0, %s33
      %s36 = ssub.s32 %s23, %s35
      %p37 = scmp.eq.s32.totalorder %s36, 0
      %s39 = sadd.s32 %s38, 1
      %s40 = scalar_select %p37, %s38, %s39
      %p43 = pneg %p37
      %p44 = scmp.eq.s32.totalorder %s16, 1
      %p45 = por %p43, %p44
      %p46 = scmp.ne.s32.totalorder %s38, %s41
      %p47 = scmp.eq.s32.totalorder %s16, 0
      %p48 = por %p46, %p47
      %p49 = scmp.ne.s32.totalorder %s38, %s41
      %p50 = scmp.eq.s32.totalorder %s21, 1
      %p51 = por %p49, %p50
      %p52 = scmp.ne.s32.totalorder %s41, %s42
      %p53 = scmp.eq.s32.totalorder %s21, 0
      %p54 = por %p52, %p53
      %p55 = scmp.ne.s32.totalorder %s41, %s42
      %p56 = scmp.eq.s32.totalorder %s22, 1
      %p57 = por %p55, %p56
      %p59 = scmp.ne.s32.totalorder %s42, %s58
      %p60 = scmp.eq.s32.totalorder %s22, 0
      %p61 = por %p59, %p60
      %s62 = ssub.s32 %s24, %s31
      %p63 = scmp.eq.s32.totalorder %s62, 0
      %s65 = sadd.s32 %s64, 1
      %s66 = scalar_select %p63, %s64, %s65
      %p69 = pneg %p63
      %p70 = scmp.eq.s32.totalorder %s16, 1
      %p71 = por %p69, %p70
      %p72 = scmp.ne.s32.totalorder %s64, %s67
      %p73 = scmp.eq.s32.totalorder %s16, 0
      %p74 = por %p72, %p73
      %p75 = scmp.ne.s32.totalorder %s64, %s67
      %p76 = scmp.eq.s32.totalorder %s21, 1
      %p77 = por %p75, %p76
      %p78 = scmp.ne.s32.totalorder %s67, %s68
      %p79 = scmp.eq.s32.totalorder %s21, 0
      %p80 = por %p78, %p79
      %p81 = scmp.ne.s32.totalorder %s67, %s68
      %p82 = scmp.eq.s32.totalorder %s22, 1
      %p83 = por %p81, %p82
      %p85 = scmp.ne.s32.totalorder %s68, %s84
      %p86 = scmp.eq.s32.totalorder %s22, 0
      %p87 = por %p85, %p86
      %s88 = ssub.s32 %s24, %s31
      %p89 = scmp.eq.s32.totalorder %s88, 0
      %s91 = sadd.s32 %s90, 1
      %s92 = scalar_select %p89, %s90, %s91
      %p95 = pneg %p89
      %p96 = scmp.eq.s32.totalorder %s16, 1
      %p97 = por %p95, %p96
      %p98 = scmp.ne.s32.totalorder %s90, %s93
      %p99 = scmp.eq.s32.totalorder %s16, 0
      %p100 = por %p98, %p99
      %p101 = scmp.ne.s32.totalorder %s90, %s93
      %p102 = scmp.eq.s32.totalorder %s21, 1
      %p103 = por %p101, %p102
      %p104 = scmp.ne.s32.totalorder %s93, %s94
      %p105 = scmp.eq.s32.totalorder %s21, 0
      %p106 = por %p104, %p105
      %p107 = scmp.ne.s32.totalorder %s93, %s94
      %p108 = scmp.eq.s32.totalorder %s22, 1
      %p109 = por %p107, %p108
      %p111 = scmp.ne.s32.totalorder %s94, %s110
      %p112 = scmp.eq.s32.totalorder %s22, 0
      %p113 = por %p111, %p112
      %s114 = ssub.s32 %s23, %s35
      %s115 = ssub.s32 %s24, %s31
      %s116 = sor.u32 %s114, %s115
      %p117 = scmp.eq.s32.totalorder %s116, 0
      %s119 = sadd.s32 %s118, 1
      %s120 = scalar_select %p117, %s118, %s119
      %p123 = pneg %p117
      %p124 = scmp.eq.s32.totalorder %s16, 1
      %p125 = por %p123, %p124
      %p126 = scmp.ne.s32.totalorder %s118, %s121
      %p127 = scmp.eq.s32.totalorder %s16, 0
      %p128 = por %p126, %p127
      %p129 = scmp.ne.s32.totalorder %s118, %s121
      %p130 = scmp.eq.s32.totalorder %s21, 1
      %p131 = por %p129, %p130
      %p132 = scmp.ne.s32.totalorder %s121, %s122
      %p133 = scmp.eq.s32.totalorder %s21, 0
      %p134 = por %p132, %p133
      %p135 = scmp.ne.s32.totalorder %s121, %s122
      %p136 = scmp.eq.s32.totalorder %s22, 1
      %p137 = por %p135, %p136
      %p139 = scmp.ne.s32.totalorder %s122, %s138
      %p140 = scmp.eq.s32.totalorder %s22, 0
      %p141 = por %p139, %p140
      %p142 = scmp.le.s32.totalorder 1, %s16
      %p143 = scmp.lt.s32.totalorder %s16, 3
      %p144 = pnand %p142, %p143
      %p145 = pneg %p144
      // Predicated region
      $region9: #{tpu_custom_call.1} parent=5 // pred_check
        _
      $region10: #{tpu_custom_call.1} parent=5 // pred_check_branch
        %147 = sbr.rel (%p144) target = $region12
      $region11: #{tpu_custom_call.1} parent=5 // pred_region
        %s148 = ssub.s32 %s16, 1
        // Predicated region
        $region13: #{tpu_custom_call.1} parent=11 // pred_check
          %p149 = pneg %p80
        $region14: #{tpu_custom_call.1} parent=11 // pred_check_branch
          %151 = sbr.rel (%p149) target = $region16
        $region15: #{tpu_custom_call.1} parent=11 // pred_region
          %153 = vsyncadd [#allocation6], 0
          %s154 = smul.addr %s26, 8
          %s155 = scalar_lea.hbm %s1, %s154
          %s156 = sshll.u32 %s155, 4
          %s157 = int_to_ptr.hbm [resolvable:$true] %s156
          %s158 = sshll.u32 [#allocation5], 4
          %s159 = int_to_ptr.vmem [resolvable:$true] %s158
          %164 = dma.hbm_to_vmem [thread:$0]  %s157, 512, %s159, [#allocation6], 128, 128, 8
        $region16: #{tpu_custom_call.1} parent=11 // pred_fallthru
          _
        // Predicated region
        $region17: #{tpu_custom_call.1} parent=11 // pred_check
          %p165 = pneg %p106
        $region18: #{tpu_custom_call.1} parent=11 // pred_check_branch
          %167 = sbr.rel (%p165) target = $region20
        $region19: #{tpu_custom_call.1} parent=11 // pred_region
          %p168 = scmp.lt.s32.totalorder %s26, 0
          %s169 = scalar_select %p168, %s26, 0
          %s170 = scalar_lea.vmem %s2, %s169
        $region20: #{tpu_custom_call.1} parent=11 // pred_fallthru
          _
      $region12: #{tpu_custom_call.1} parent=5 // pred_fallthru
        _
      %p171 = scmp.lt.s32.totalorder %s16, 2
      // Predicated region
      $region21: #{tpu_custom_call.1} parent=5 // pred_check
        %p172 = pneg %p171
      $region22: #{tpu_custom_call.1} parent=5 // pred_check_branch
        %174 = sbr.rel (%p172) target = $region24
      $region23: #{tpu_custom_call.1} parent=5 // pred_region
        // Predicated region
        $region25: #{tpu_custom_call.1} parent=23 // pred_check
          %p175 = pneg %p48
        $region26: #{tpu_custom_call.1} parent=23 // pred_check_branch
          %177 = sbr.rel (%p175) target = $region28
        $region27: #{tpu_custom_call.1} parent=23 // pred_region
          %s178 = sand.u32 %s38, 1
          %s179 = scalar_lea.sflag [#allocation3], %s178
          %s180 = sand.u32 %s38, 1
          %s181 = smul.addr %s180, 8
          %s182 = scalar_lea.vmem [#allocation2], %s181
          %184 = vsyncadd %s179, 0
          %s185 = smul.addr %s23, 8
          %s186 = scalar_lea.hbm %s0, %s185
          %s188 = sshll.u32 %s186, 4
          %s189 = int_to_ptr.hbm [resolvable:$true] %s188
          %s190 = sshll.u32 %s182, 4
          %s191 = int_to_ptr.vmem [resolvable:$true] %s190
          %193 = dma.hbm_to_vmem [thread:$0]  %s189, 128, %s191, %s179
        $region28: #{tpu_custom_call.1} parent=23 // pred_fallthru
          _
      $region24: #{tpu_custom_call.1} parent=5 // pred_fallthru
        _
      %p194 = scmp.le.s32.totalorder 1, %s16
      %p195 = scmp.lt.s32.totalorder %s16, 3
      %p196 = pnand %p194, %p195
      %p197 = pneg %p196
      // Predicated region
      $region29: #{tpu_custom_call.1} parent=5 // pred_check
        _
      $region30: #{tpu_custom_call.1} parent=5 // pred_check_branch
        %199 = sbr.rel (%p196) target = $region32
      $region31: #{tpu_custom_call.1} parent=5 // pred_region
        %s200 = ssub.s32 %s16, 1
        %s201 = sand.u32 %s41, 1
        %s202 = scalar_lea.sflag [#allocation3], %s201
        %s203 = sand.u32 %s41, 1
        %s204 = smul.addr %s203, 8
        %s205 = scalar_lea.vmem [#allocation2], %s204
        // Predicated region
        $region33: #{tpu_custom_call.1} parent=31 // pred_check
          %p206 = pneg %p54
        $region34: #{tpu_custom_call.1} parent=31 // pred_check_branch
          %208 = sbr.rel (%p206) target = $region36
        $region35: #{tpu_custom_call.1} parent=31 // pred_region
          %210 = dma.done %s202, 128
        $region36: #{tpu_custom_call.1} parent=31 // pred_fallthru
          _
        // Predicated region
        $region37: #{tpu_custom_call.1} parent=31 // pred_check
          %p211 = pneg %p80
        $region38: #{tpu_custom_call.1} parent=31 // pred_check_branch
          %213 = sbr.rel (%p211) target = $region40
        $region39: #{tpu_custom_call.1} parent=31 // pred_region
          %215 = dma.done [#allocation6], 512
        $region40: #{tpu_custom_call.1} parent=31 // pred_fallthru
          _
        %s216 = sand.u32 %s41, 1
        %s217 = scalar_lea.sflag [#allocation3], %s216
        %s218 = sand.u32 %s41, 1
        %s219 = smul.addr %s218, 8
        %s220 = scalar_lea.vmem [#allocation2], %s219
        %p221 = pneg %p54
        %p222 = pneg %p51
        %p223 = pneg %p80
        %p224 = pneg %p77
        %p225 = scmp.lt.s32.totalorder %s26, 0
        %s226 = scalar_select %p225, %s26, 0
        %s227 = scalar_lea.vmem %s2, %s226
        %p228 = pneg %p106
        %p229 = pneg %p103
        %p230 = pneg %p134
        %p231 = pneg %p131
        %s232 = sand.u32 %s121, 1
        %s233 = scalar_lea.sflag [#allocation4], %s232
        %s234 = sand.u32 %s121, 1
        %s235 = smul.addr %s234, 8
        %s236 = scalar_lea.vmem [#allocation7], %s235
        %p237 = scmp.lt.s32.totalorder %s26, 0
        %s238 = scalar_select %p237, %s26, 0
        %s239 = scalar_lea.vmem %s2, %s238
        %v240 = vld [vmem:[#allocation5] sm:$0xff]
        %v241 = vld [vmem:[#allocation5 + $0x8] sm:$0xff]
        %v242 = vld [vmem:[#allocation5 + $0x10] sm:$0xff]
        %v243 = vld [vmem:[#allocation5 + $0x18] sm:$0xff]
        %v244 = vld [vmem:[%s205] sm:$0xff]
        %v245 = vld [vmem:[%s239] sm:$0x1]
        %v247 = vperm.slane %v245, 0
        %vm249 = vcmask 261120
        %v251 = vsel %vm249, %v244, 0
        %253 = vmatpush.msra.mxu0 0.0
        %254 = vmatpush.msra.mxu0 0.0
        %255 = vmatpush.msra.mxu0 0.0
        %256 = vmatpush.msra.mxu0 0.0
        %257 = vmatpush.msra.mxu0 0.0
        %258 = vmatpush.msra.mxu0 0.0
        %259 = vmatpush.msra.mxu0 0.0
        %260 = vmatpush.msra.mxu0 0.0
        %261 = vmatpush.msra.mxu0 0.0
        %262 = vmatpush.msra.mxu0 0.0
        %263 = vmatpush.msra.mxu0 0.0
        %264 = vmatpush.msra.mxu0 0.0
        %265 = vmatpush.msra.mxu0 %v243
        %266 = vmatpush.msra.mxu0 %v242
        %267 = vmatpush.msra.mxu0 %v241
        %268 = vmatpush.msra.mxu0 %v240
        %269 = vmatmul.f32.gmra.mxu0 %v251
        %v270 = vpop.f32.mrf.mxu0
        %v271 = vadd.f32 %v247, %v270
        %272 = vdwg.mxu0
        %v273 = vmul.f32 %v271, 0.5
        %v274 = vmul.f32 %v271, 0.70710677
        %v275 = vmul.f32 %v274, %v274
        %v276 = vmin.f32 16.0, %v275
        %v277 = vmul.f32 %v276, 2.1237322e-06
        %v278 = vadd.f32 %v277, 0.00028619796
        %v279 = vmul.f32 %v276, %v278
        %v280 = vadd.f32 %v279, 0.0036580483
        %v281 = vmul.f32 %v276, %v280
        %v282 = vadd.f32 %v281, 0.05243302
        %v283 = vmul.f32 %v276, %v282
        %v284 = vadd.f32 %v283, 0.18741608
        %v285 = vmul.f32 %v276, %v284
        %v286 = vadd.f32 %v285, 1.1283791
        %v287 = vmul.f32 %v274, %v286
        %v288 = vmul.f32 %v276, 3.8918573e-05
        %v289 = vadd.f32 %v288, 0.001143296
        %v290 = vmul.f32 %v276, %v289
        %v291 = vadd.f32 %v290, 0.014752088
        %v292 = vmul.f32 %v276, %v291
        %v293 = vadd.f32 %v292, 0.112945676
        %v294 = vmul.f32 %v276, %v293
        %v295 = vadd.f32 %v294, 0.4994258
        %v296 = vmul.f32 %v276, %v295
        %v297 = vadd.f32 %v296, 1.0
        %v298 = vrcp.pop %v297
        %v299 = vmul.f32 %v297, %v298
        %v300 = vsub.f32 1.0, %v299
        %v301 = vmul.f32 %v298, %v300
        %v302 = vadd.f32 %v298, %v301
        %vm303 = vweird.f32 %v297
        %vm304 = vweird.f32 %v298
        %vm305 = vmor %vm303, %vm304
        %v306 = vsel %vm305, %v298, %v302
        %v307 = vand.u32 2147483647, %v297
        %vm308 = vcmp.eq.f32.partialorder %v307, 8.507059e+37
        %v309 = vand.u32 %v297, 2147483648
        %v310 = vor.u32 1.1754944e-38, %v309
        %v311 = vsel %vm308, %v310, %v306
        %v312 = vmul.f32 %v287, %v311
        %v313 = vmin.f32 %v312, 1.0
        %v314 = vmax.f32 %v313, -1.0
        %v315 = vadd.f32 %v314, 1.0
        %v316 = vmul.f32 %v273, %v315
        %317 = vst.msk [vmem:[%s236] sm:$0xff] %vm249, %v316
        %s318 = sand.u32 %s121, 1
        %s319 = scalar_lea.sflag [#allocation4], %s318
        %s320 = sand.u32 %s121, 1
        %s321 = smul.addr %s320, 8
        %s322 = scalar_lea.vmem [#allocation7], %s321
        // Predicated region
        $region41: #{tpu_custom_call.1} parent=31 // pred_check
          %p323 = pneg %p131
        $region42: #{tpu_custom_call.1} parent=31 // pred_check_branch
          %325 = sbr.rel (%p323) target = $region44
        $region43: #{tpu_custom_call.1} parent=31 // pred_region
          %327 = vsyncadd %s319, 0
          %s328 = sadd.s32 %s26, %s25
          %s329 = smul.addr %s328, 8
          %s330 = scalar_lea.hbm %s3, %s329
          %s332 = sshll.u32 %s322, 4
          %s333 = int_to_ptr.vmem [resolvable:$true] %s332
          %s334 = sshll.u32 %s330, 4
          %s335 = int_to_ptr.hbm [resolvable:$true] %s334
          %337 = dma.vmem_to_hbm [thread:$0]  %s333, 128, %s335, %s319
        $region44: #{tpu_custom_call.1} parent=31 // pred_fallthru
          _
      $region32: #{tpu_custom_call.1} parent=5 // pred_fallthru
        _
      %p338 = scmp.le.s32.totalorder 2, %s16
      // Predicated region
      $region45: #{tpu_custom_call.1} parent=5 // pred_check
        %p339 = pneg %p338
      $region46: #{tpu_custom_call.1} parent=5 // pred_check_branch
        %341 = sbr.rel (%p339) target = $region48
      $region47: #{tpu_custom_call.1} parent=5 // pred_region
        %s342 = ssub.s32 %s16, 2
        // Predicated region
        $region49: #{tpu_custom_call.1} parent=47 // pred_check
          %p343 = pneg %p137
        $region50: #{tpu_custom_call.1} parent=47 // pred_check_branch
          %345 = sbr.rel (%p343) target = $region52
        $region51: #{tpu_custom_call.1} parent=47 // pred_region
          %s346 = sand.u32 %s122, 1
          %s347 = scalar_lea.sflag [#allocation4], %s346
          %s348 = sand.u32 %s122, 1
          %s349 = smul.addr %s348, 8
          %s350 = scalar_lea.vmem [#allocation7], %s349
          %352 = dma.done %s347, 128
        $region52: #{tpu_custom_call.1} parent=47 // pred_fallthru
          _
      $region48: #{tpu_custom_call.1} parent=5 // pred_fallthru
        _
    $region6: #{tpu_custom_call.1} parent=1 // loop_footer
      %s20 = sadd.s32 1, %s16
    $region7: #{tpu_custom_call.1} parent=1 // loop_footer_branch
      %15 = sbr.rel target = $region3
    $region8: #{tpu_custom_call.1} parent=1 // loop_exit
      _
    %353 = vsyncpa [#allocation3], 1
    %s354 = scalar_lea.sflag [#allocation3], 1
    %355 = vsyncpa %s354, 1
    %356 = vsyncpa [#allocation6], 1
    %357 = vsyncpa [#allocation4], 1
    %s358 = scalar_lea.sflag [#allocation4], 1
    %359 = vsyncpa %s358, 1

</llo_original>
